<compile_context>
chip_gen: v7x
topology: tpu7x:2x2x1
jax: 0.10.0
libtpu: 0.0.40
codegen_flags: <defaults>
</compile_context>

<pallas_src>
import functools

import jax
import jax.numpy as jnp
from jax import lax
from jax.experimental import pallas as pl
from jax.experimental.pallas import tpu as pltpu


def _round_up(x, m):
    return ((x + m - 1) // m) * m


def _center_disc_kernel(onehot_ref, scale_ref, feat_ref, out_ref, gram_ref, *,
                        num_classes, num_pairs):
    k = pl.program_id(0)

    @pl.when(k == 0)
    def _init():
        gram_ref[...] = jnp.zeros_like(gram_ref)

    # Per-class feature sums for this D tile: (K_pad, TILE_D), f32 accumulation (MXU).
    sums = jnp.dot(onehot_ref[...], feat_ref[...],
                   preferred_element_type=jnp.float32)
    # Accumulate Gram of raw class sums: G += S @ S^T (contract over TILE_D, MXU).
    gram_ref[...] += lax.dot_general(
        sums, sums,
        dimension_numbers=(((1,), (1,)), ((), ())),
        preferred_element_type=jnp.float32)

    @pl.when(k == pl.num_programs(0) - 1)
    def _finalize():
        # Convert sums-Gram into means-Gram: G_mean[i,j] = G[i,j] / (c_i * c_j).
        g = gram_ref[...] * scale_ref[...]
        kp = g.shape[0]
        row = lax.broadcasted_iota(jnp.int32, (kp, kp), 0)
        col = lax.broadcasted_iota(jnp.int32, (kp, kp), 1)
        eye = (row == col).astype(jnp.float32)
        diag_col = jnp.sum(g * eye, axis=1, keepdims=True)   # (kp, 1)
        diag_row = jnp.sum(g * eye, axis=0, keepdims=True)   # (1, kp)
        # ||c_i - c_j||^2, clamped (f32 cancellation can go slightly negative).
        dist2 = jnp.maximum(diag_col + diag_row - 2.0 * g, 0.0)
        dist = jnp.sqrt(dist2)
        valid = (row < col) & (col < num_classes)
        total = jnp.sum(jnp.where(valid, dist, 0.0), axis=1, keepdims=True)
        total = jnp.sum(total, axis=0, keepdims=True)          # (1, 1)
        out_ref[...] = total / jnp.float32(num_pairs)


def center_disc(x, labels, num_classes, *, tile_d=None):
    """Forward of CenterDisc. x: (N,C,H,W) or (N,Ch,P); labels: (N,) int."""
    assert num_classes >= 2
    # Keep bf16 inputs as bf16 (halves HBM traffic); otherwise use f32.
    if x.dtype not in (jnp.bfloat16, jnp.float32):
        x = x.astype(jnp.float32)
    if x.ndim == 4:
        n, c, h, w = x.shape
        x = x.reshape(n, c * h, w)          # 'n c h w -> n (c h) w'
    n = x.shape[0]
    feat = x.reshape(n, -1)                  # Frobenius norm == flat L2 norm
    d = feat.shape[1]
    itemsize = jnp.dtype(feat.dtype).itemsize

    # Padded class count (sublane-friendly); padding classes get zero rows.
    k_pad = max(8, _round_up(num_classes, 8))

    labels = labels.astype(jnp.int32)
    onehot = (labels[None, :] ==
              jnp.arange(k_pad, dtype=jnp.int32)[:, None])          # (k_pad, N)
    counts = jnp.sum(onehot.astype(jnp.float32), axis=1, keepdims=True)
    # Empty class -> inv=1, sums=0 -> center exactly zero (matches torch code).
    inv_counts = 1.0 / jnp.maximum(counts, 1.0)                     # (k_pad, 1)
    scale_outer = (inv_counts * inv_counts.T).astype(jnp.float32)   # (k_pad, k_pad)
    onehot = onehot.astype(feat.dtype)

    # Tile the D axis; keep the double-buffered (N, TILE_D) block well under the
    # 32 MiB default scoped VMEM (v7x has only 64 MiB physical).
    if tile_d is None:
        per_buffer_budget = 8 * 1024 * 1024
        tile_d = (per_buffer_budget // max(n * itemsize, 1)) // 128 * 128
        tile_d = max(128, min(4096, tile_d))
    tile_d = max(128, _round_up(min(tile_d, _round_up(d, 128)), 128))
    d_pad = _round_up(d, tile_d)
    if d_pad != d:
        feat = jnp.pad(feat, ((0, 0), (0, d_pad - d)))   # zero-pad: no effect
    num_tiles = d_pad // tile_d

    num_pairs = num_classes * (num_classes - 1) // 2
    kernel = functools.partial(_center_disc_kernel,
                               num_classes=num_classes, num_pairs=num_pairs)

    grid_spec = pltpu.PrefetchScalarGridSpec(
        num_scalar_prefetch=0,
        grid=(num_tiles,),
        in_specs=[
            pl.BlockSpec((k_pad, n), lambda k: (0, 0)),        # onehot (resident)
            pl.BlockSpec((k_pad, k_pad), lambda k: (0, 0)),    # 1/count outer (resident)
            pl.BlockSpec((n, tile_d), lambda k: (0, k)),       # feature D tiles
        ],
        out_specs=pl.BlockSpec((1, 1), lambda k: (0, 0)),
        scratch_shapes=[pltpu.VMEM((k_pad, k_pad), jnp.float32)],
    )
    cost = pl.CostEstimate(
        flops=2 * k_pad * n * d_pad + 2 * k_pad * k_pad * d_pad,
        transcendentals=num_pairs,
        bytes_accessed=n * d_pad * itemsize + k_pad * n * itemsize
                       + k_pad * k_pad * 4 + 4,
    )

    out = pl.pallas_call(
        kernel,
        out_shape=jax.ShapeDtypeStruct((1, 1), jnp.float32),
        grid_spec=grid_spec,
        compiler_params=pltpu.CompilerParams(
            dimension_semantics=("arbitrary",)),   # D is a reduction axis
        cost_estimate=cost,
    )(onehot, scale_outer, feat)

    # TODO(synk): grad_reverse is identity in forward; gradient reversal would
    # need jax.custom_vjp on this wrapper (not a kernel-level concern).
    # TODO(synk): for very large N*D on v7x, a leading 2-way "parallel" grid axis
    # with per-core partial Gram outputs would use both TensorCores.
    return out[0, 0]


def _reference(x, labels, num_classes):
    """Pure-JAX reference mirroring the PyTorch code, for verification."""
    x = x.astype(jnp.float32)
    if x.ndim == 4:
        n, c, h, w = x.shape
        x = x.reshape(n, c * h, w)
    centers = jnp.zeros((num_classes, x.shape[1], x.shape[2]), jnp.float32)
    for k in range(num_classes):
        mask = (labels == k).astype(jnp.float32)
        cnt = jnp.sum(mask)
        mean_k = jnp.sum(x * mask[:, None, None], axis=0) / jnp.maximum(cnt, 1.0)
        centers = centers.at[k].set(jnp.where(cnt > 0, mean_k, 0.0))
    dist = 0.0
    num = 0
    for i in range(num_classes - 1):
        for j in range(i + 1, num_classes):
            diff = centers[i] - centers[j]
            dist = dist + jnp.sqrt(jnp.sum(diff * diff))
            num += 1
    return dist / num


if __name__ == "__main__":
    key = jax.random.PRNGKey(0)
    kx, kl = jax.random.split(key)

    N, C, H, W = 8, 4, 16, 16
    NUM_CLASSES = 4

    x = jax.random.normal(kx, (N, C, H, W), dtype=jnp.float32)
    labels = jax.random.randint(kl, (N,), 0, NUM_CLASSES, dtype=jnp.int32)

    # Small tile to exercise the multi-step D accumulation / pipelining path.
    out = jax.block_until_ready(center_disc(x, labels, NUM_CLASSES, tile_d=256))
    ref = jax.block_until_ready(_reference(x, labels, NUM_CLASSES))
    assert jnp.allclose(out, ref, rtol=1e-4, atol=1e-4), (out, ref)

    # 3-D (n, channels, points) input with non-128-multiple D (exercises padding).
    x3 = jax.random.normal(kx, (N, 6, 32), dtype=jnp.float32)
    out3 = jax.block_until_ready(center_disc(x3, labels, NUM_CLASSES))
    ref3 = jax.block_until_ready(_reference(x3, labels, NUM_CLASSES))
    assert jnp.allclose(out3, ref3, rtol=1e-4, atol=1e-4), (out3, ref3)

    print("KERNEL_OK")
</pallas_src>

<mosaic_0001>
module attributes {stable_mosaic.version = 11 : i64} {
  func.func @_center_disc_kernel(%arg0: i32, %arg1: memref<8x8xf32, #tpu.memory_space<vmem>>, %arg2: memref<8x8xf32, #tpu.memory_space<vmem>>, %arg3: memref<8x256xf32, #tpu.memory_space<vmem>>, %arg4: memref<1x1xf32, #tpu.memory_space<vmem>>, %arg5: memref<8x8xf32, #tpu.memory_space<vmem>>) attributes {dimension_semantics = [#tpu.dimension_semantics<arbitrary>], iteration_bounds = array<i64: 4>, scalar_prefetch = 0 : i64, scratch_operands = 1 : i64, tpu.core_type = #tpu.core_type<tc>, window_params = [{pipeline_mode = #tpu.pipeline_mode<synchronous>, transform_indices = @transform_0, window_bounds = array<i64: 8, 8>}, {pipeline_mode = #tpu.pipeline_mode<synchronous>, transform_indices = @transform_1, window_bounds = array<i64: 8, 8>}, {transform_indices = @transform_2, window_bounds = array<i64: 8, 256>}, {pipeline_mode = #tpu.pipeline_mode<synchronous>, transform_indices = @transform_3, window_bounds = array<i64: 1, 1>}]} {
    %c0_i32 = arith.constant 0 : i32
    %0 = arith.cmpi eq, %arg0, %c0_i32 : i32
    %1 = arith.extui %0 : i1 to i32
    %c0_i32_0 = arith.constant 0 : i32
    %2 = arith.cmpi ne, %1, %c0_i32_0 : i32
    scf.if %2 {
      %cst_10 = arith.constant 0.000000e+00 : f32
      %13 = vector.broadcast %cst_10 : f32 to vector<8x8xf32>
      %c0_11 = arith.constant 0 : index
      %c0_12 = arith.constant 0 : index
      %14 = vector.load %arg5[%c0_11, %c0_12] : memref<8x8xf32, #tpu.memory_space<vmem>>, vector<8x8xf32>
      tpu.vector_store %arg5[%c0_11, %c0_12], %13 {strides = array<i32>} : memref<8x8xf32, #tpu.memory_space<vmem>>, vector<8x8xf32>,
    } else {
    }
    %c0 = arith.constant 0 : index
    %c0_1 = arith.constant 0 : index
    %3 = vector.load %arg1[%c0, %c0_1] : memref<8x8xf32, #tpu.memory_space<vmem>>, vector<8x8xf32>
    %c0_2 = arith.constant 0 : index
    %c0_3 = arith.constant 0 : index
    %4 = vector.load %arg3[%c0_2, %c0_3] : memref<8x256xf32, #tpu.memory_space<vmem>>, vector<8x256xf32>
    %cst = arith.constant dense<0.000000e+00> : vector<8x256xf32>
    %5 = tpu.matmul %3, %4, %cst {dimension_numbers = #tpu.dot_dimension_numbers<[1], [0], [0], [1], [0, 0, 1, 1], [], []>} : vector<8x8xf32>, vector<8x256xf32>, vector<8x256xf32> -> vector<8x256xf32>
    %c0_4 = arith.constant 0 : index
    %c0_5 = arith.constant 0 : index
    %6 = vector.load %arg5[%c0_4, %c0_5] : memref<8x8xf32, #tpu.memory_space<vmem>>, vector<8x8xf32>
    %cst_6 = arith.constant dense<0.000000e+00> : vector<8x8xf32>
    %7 = tpu.matmul %5, %5, %cst_6 {dimension_numbers = #tpu.dot_dimension_numbers<[1], [1], [0], [0], [0, 0, 1, 0], [], []>} : vector<8x256xf32>, vector<8x256xf32>, vector<8x8xf32> -> vector<8x8xf32>
    %8 = arith.addf %6, %7 : vector<8x8xf32>
    %c0_7 = arith.constant 0 : index
    %c0_8 = arith.constant 0 : index
    %9 = vector.load %arg5[%c0_7, %c0_8] : memref<8x8xf32, #tpu.memory_space<vmem>>, vector<8x8xf32>
    tpu.vector_store %arg5[%c0_7, %c0_8], %8 {strides = array<i32>} : memref<8x8xf32, #tpu.memory_space<vmem>>, vector<8x8xf32>,
    %c3_i32 = arith.constant 3 : i32
    %10 = arith.cmpi eq, %arg0, %c3_i32 : i32
    %11 = arith.extui %10 : i1 to i32
    %c0_i32_9 = arith.constant 0 : i32
    %12 = arith.cmpi ne, %11, %c0_i32_9 : i32
    scf.if %12 {
      %c0_10 = arith.constant 0 : index
      %c0_11 = arith.constant 0 : index
      %13 = vector.load %arg5[%c0_10, %c0_11] : memref<8x8xf32, #tpu.memory_space<vmem>>, vector<8x8xf32>
      %c0_12 = arith.constant 0 : index
      %c0_13 = arith.constant 0 : index
      %14 = vector.load %arg2[%c0_12, %c0_13] : memref<8x8xf32, #tpu.memory_space<vmem>>, vector<8x8xf32>
      %15 = arith.mulf %13, %14 : vector<8x8xf32>
      %16 = tpu.iota {dimensions = array<i32: 0>} : vector<8x8xi32>
      %17 = tpu.iota {dimensions = array<i32: 1>} : vector<8x8xi32>
      %18 = arith.cmpi eq, %16, %17 : vector<8x8xi32>
      %19 = arith.extui %18 : vector<8x8xi1> to vector<8x8xi32>
      %20 = arith.sitofp %19 : vector<8x8xi32> to vector<8x8xf32>
      %21 = arith.mulf %15, %20 : vector<8x8xf32>
      %cst_14 = arith.constant dense<0.000000e+00> : vector<8xf32>
      %22 = vector.multi_reduction <add>, %21, %cst_14 [1] : vector<8x8xf32> to vector<8xf32>
      %23 = vector.shape_cast %22 : vector<8xf32> to vector<8x1xf32>
      %24 = arith.mulf %15, %20 : vector<8x8xf32>
      %cst_15 = arith.constant dense<0.000000e+00> : vector<8xf32>
      %25 = vector.multi_reduction <add>, %24, %cst_15 [0] : vector<8x8xf32> to vector<8xf32>
      %26 = vector.shape_cast %25 : vector<8xf32> to vector<1x8xf32>
      %27 = vector.broadcast %23 : vector<8x1xf32> to vector<8x8xf32>
      %28 = vector.broadcast %26 : vector<1x8xf32> to vector<8x8xf32>
      %29 = arith.addf %27, %28 : vector<8x8xf32>
      %cst_16 = arith.constant 2.000000e+00 : f32
      %30 = vector.broadcast %cst_16 : f32 to vector<8x8xf32>
      %31 = arith.mulf %30, %15 : vector<8x8xf32>
      %32 = arith.subf %29, %31 : vector<8x8xf32>
      %cst_17 = arith.constant 0.000000e+00 : f32
      %33 = vector.broadcast %cst_17 : f32 to vector<8x8xf32>
      %34 = arith.maximumf %32, %33 : vector<8x8xf32>
      %35 = math.sqrt %34 : vector<8x8xf32>
      %36 = arith.cmpi slt, %16, %17 : vector<8x8xi32>
      %c4_i32 = arith.constant 4 : i32
      %37 = vector.broadcast %c4_i32 : i32 to vector<8x8xi32>
      %38 = arith.cmpi slt, %17, %37 : vector<8x8xi32>
      %39 = arith.andi %36, %38 : vector<8x8xi1>
      %cst_18 = arith.constant 0.000000e+00 : f32
      %40 = vector.broadcast %cst_18 : f32 to vector<8x8xf32>
      %41 = arith.select %39, %35, %40 : vector<8x8xi1>, vector<8x8xf32>
      %cst_19 = arith.constant dense<0.000000e+00> : vector<8xf32>
      %42 = vector.multi_reduction <add>, %41, %cst_19 [1] : vector<8x8xf32> to vector<8xf32>
      %43 = vector.shape_cast %42 : vector<8xf32> to vector<8x1xf32>
      %cst_20 = arith.constant dense<0.000000e+00> : vector<1xf32>
      %44 = vector.multi_reduction <add>, %43, %cst_20 [0] : vector<8x1xf32> to vector<1xf32>
      %45 = vector.shape_cast %44 : vector<1xf32> to vector<1x1xf32>
      %cst_21 = arith.constant 6.000000e+00 : f32
      %46 = vector.broadcast %cst_21 : f32 to vector<1x1xf32>
      %47 = arith.divf %45, %46 : vector<1x1xf32>
      %c0_22 = arith.constant 0 : index
      %c0_23 = arith.constant 0 : index
      %48 = vector.load %arg4[%c0_22, %c0_23] : memref<1x1xf32, #tpu.memory_space<vmem>>, vector<1x1xf32>
      tpu.vector_store %arg4[%c0_22, %c0_23], %47 {strides = array<i32>} : memref<1x1xf32, #tpu.memory_space<vmem>>, vector<1x1xf32>,
    } else {
    }
    return
  }
  func.func @transform_0(%arg0: i32) -> (i32, i32) {
    %c0_i32 = arith.constant 0 : i32
    %c0_i32_0 = arith.constant 0 : i32
    %c0_i32_1 = arith.constant 0 : i32
    return %c0_i32, %c0_i32_0 : i32, i32
  }
  func.func @transform_1(%arg0: i32) -> (i32, i32) {
    %c0_i32 = arith.constant 0 : i32
    %c0_i32_0 = arith.constant 0 : i32
    %c0_i32_1 = arith.constant 0 : i32
    return %c0_i32, %c0_i32_0 : i32, i32
  }
  func.func @transform_2(%arg0: i32) -> (i32, i32) {
    %c0_i32 = arith.constant 0 : i32
    %c0_i32_0 = arith.constant 0 : i32
    return %c0_i32, %arg0 : i32, i32
  }
  func.func @transform_3(%arg0: i32) -> (i32, i32) {
    %c0_i32 = arith.constant 0 : i32
    %c0_i32_0 = arith.constant 0 : i32
    %c0_i32_1 = arith.constant 0 : i32
    return %c0_i32, %c0_i32_0 : i32, i32
  }
}

</mosaic_0001>

<llo_original>
// kernel: tpu_custom_call.1
$region0: #{tpu_custom_call.1}
  #allocation0 [shape = 'u32[]', space=smem, size = 0x4, offset = 0x4, fixed_abs, tag = 'smem constant byte address 0x4 - core index']
  #allocation1 [shape = 'u32[144,128]{1,0:T(1,128)}', space=vmem, size = 0x12000, scoped, tag = 'internal scratch']
  #allocation2 [shape = 'f32[8,8]{1,0:T(8,128)}', space=vmem, size = 0x1000, scoped, tag = 'scratch operand']
  %s0 = inlined_call_operand.hbm [shape: f32[8,8], index: 0, kind: input, shape index: {}]
  %s1 = inlined_call_operand.hbm [shape: f32[8,8], index: 1, kind: input, shape index: {}]
  %s2 = inlined_call_operand.hbm [shape: f32[8,1024], index: 2, kind: input, shape index: {}]
  %s3 = inlined_call_operand.hbm [shape: f32[1,1], index: 3, kind: output, shape index: {}]
  %s4 = sld [smem:[#allocation0]]
  $region65: #{tpu_custom_call.1} parent=0
    _
  %s6 = ssub.s32 1, %s4
  %s7 = scalar_select 0, %s6, %s4
  $region1: #{tpu_custom_call.1} parent=0
    #allocation3 [shape = 'u8[4096]{0}', space=vmem, size = 0x1000, scoped, tag = 'input window, operand 0, single buffered']
    #allocation4 [shape = 's32[2]{0}', space=sflag, size = 0x8, scoped, tag = 'scoped memory for tpu_custom_call.1']
    #allocation5 [shape = 's32[2]{0}', space=sflag, size = 0x8, scoped, tag = 'scoped memory for tpu_custom_call.1']
    #allocation6 [shape = 'u8[4096]{0}', space=vmem, size = 0x1000, scoped, tag = 'input window, operand 1, single buffered']
    #allocation7 [shape = 's32[1]{0}', space=sflag, size = 0x4, scoped, tag = 'scoped memory for tpu_custom_call.1']
    #allocation8 [shape = 'u8[16384]{0}', space=vmem, size = 0x4000, scoped, tag = 'input window, operand 2']
    #allocation9 [shape = 'u8[512]{0}', space=vmem, size = 0x400, scoped, tag = 'output window, operand 0, single buffered']
    %8 = vsyncpa [#allocation4], 0
    %9 = vsyncpa [#allocation7], 0
    %10 = vsyncpa [#allocation5], 0
    loop: start=0, step=1, limit=6
    $region2: #{tpu_custom_call.1} parent=1 // loop_pre_header
      _
    $region3: #{tpu_custom_call.1} parent=1 // loop_header
      %s12 = sphi 0, %s16
      %p13 = scmp.ge.s32.totalorder %s12, 6
      %s20 = sphi 0, %s20
      %s22 = sphi 0, %s20
      %s23 = sphi 0, %s22
      %s37 = sphi 0, %s23
      %s41 = sphi 0, %s41
      %s43 = sphi 0, %s41
      %s44 = sphi 0, %s43
      %s58 = sphi 0, %s44
      %s64 = sphi 0, %s66
      %s67 = sphi 0, %s64
      %s68 = sphi 0, %s67
      %s84 = sphi 0, %s68
      %s88 = sphi 0, %s88
      %s90 = sphi 0, %s88
      %s91 = sphi 0, %s90
      %s105 = sphi 0, %s91
    $region4: #{tpu_custom_call.1} parent=1 // loop_header_branch
      %15 = sbr.rel (%p13) target = $region8
    $region5: #{tpu_custom_call.1} parent=1 // loop_body
      %s17 = ssub.s32 %s12, 1
      %s18 = ssub.s32 %s12, 2
      %s19 = sadd.s32 %s12, 1
      %s21 = sadd.s32 %s20, 1
      %p24 = scmp.eq.s32.totalorder %s12, 3
      %p25 = scmp.ne.s32.totalorder %s20, %s22
      %p26 = scmp.eq.s32.totalorder %s12, 0
      %p27 = por %p25, %p26
      %p28 = scmp.ne.s32.totalorder %s20, %s22
      %p29 = scmp.eq.s32.totalorder %s17, 3
      %p30 = por %p28, %p29
      %p31 = scmp.ne.s32.totalorder %s22, %s23
      %p32 = scmp.eq.s32.totalorder %s17, 0
      %p33 = por %p31, %p32
      %p34 = scmp.ne.s32.totalorder %s22, %s23
      %p35 = scmp.eq.s32.totalorder %s18, 3
      %p36 = por %p34, %p35
      %p38 = scmp.ne.s32.totalorder %s23, %s37
      %p39 = scmp.eq.s32.totalorder %s18, 0
      %p40 = por %p38, %p39
      %s42 = sadd.s32 %s41, 1
      %p45 = scmp.eq.s32.totalorder %s12, 3
      %p46 = scmp.ne.s32.totalorder %s41, %s43
      %p47 = scmp.eq.s32.totalorder %s12, 0
      %p48 = por %p46, %p47
      %p49 = scmp.ne.s32.totalorder %s41, %s43
      %p50 = scmp.eq.s32.totalorder %s17, 3
      %p51 = por %p49, %p50
      %p52 = scmp.ne.s32.totalorder %s43, %s44
      %p53 = scmp.eq.s32.totalorder %s17, 0
      %p54 = por %p52, %p53
      %p55 = scmp.ne.s32.totalorder %s43, %s44
      %p56 = scmp.eq.s32.totalorder %s18, 3
      %p57 = por %p55, %p56
      %p59 = scmp.ne.s32.totalorder %s44, %s58
      %p60 = scmp.eq.s32.totalorder %s18, 0
      %p61 = por %p59, %p60
      %s62 = ssub.s32 %s12, %s19
      %p63 = scmp.eq.s32.totalorder %s62, 0
      %s65 = sadd.s32 %s64, 1
      %s66 = scalar_select %p63, %s64, %s65
      %p69 = pneg %p63
      %p70 = scmp.eq.s32.totalorder %s12, 3
      %p71 = por %p69, %p70
      %p72 = scmp.ne.s32.totalorder %s64, %s67
      %p73 = scmp.eq.s32.totalorder %s12, 0
      %p74 = por %p72, %p73
      %p75 = scmp.ne.s32.totalorder %s64, %s67
      %p76 = scmp.eq.s32.totalorder %s17, 3
      %p77 = por %p75, %p76
      %p78 = scmp.ne.s32.totalorder %s67, %s68
      %p79 = scmp.eq.s32.totalorder %s17, 0
      %p80 = por %p78, %p79
      %p81 = scmp.ne.s32.totalorder %s67, %s68
      %p82 = scmp.eq.s32.totalorder %s18, 3
      %p83 = por %p81, %p82
      %p85 = scmp.ne.s32.totalorder %s68, %s84
      %p86 = scmp.eq.s32.totalorder %s18, 0
      %p87 = por %p85, %p86
      %s89 = sadd.s32 %s88, 1
      %p92 = scmp.eq.s32.totalorder %s12, 3
      %p93 = scmp.ne.s32.totalorder %s88, %s90
      %p94 = scmp.eq.s32.totalorder %s12, 0
      %p95 = por %p93, %p94
      %p96 = scmp.ne.s32.totalorder %s88, %s90
      %p97 = scmp.eq.s32.totalorder %s17, 3
      %p98 = por %p96, %p97
      %p99 = scmp.ne.s32.totalorder %s90, %s91
      %p100 = scmp.eq.s32.totalorder %s17, 0
      %p101 = por %p99, %p100
      %p102 = scmp.ne.s32.totalorder %s90, %s91
      %p103 = scmp.eq.s32.totalorder %s18, 3
      %p104 = por %p102, %p103
      %p106 = scmp.ne.s32.totalorder %s91, %s105
      %p107 = scmp.eq.s32.totalorder %s18, 0
      %p108 = por %p106, %p107
      %p109 = scmp.le.s32.totalorder 1, %s12
      %p110 = scmp.lt.s32.totalorder %s12, 5
      %p111 = pnand %p109, %p110
      %p112 = pneg %p111
      // Predicated region
      $region9: #{tpu_custom_call.1} parent=5 // pred_check
        _
      $region10: #{tpu_custom_call.1} parent=5 // pred_check_branch
        %114 = sbr.rel (%p111) target = $region12
      $region11: #{tpu_custom_call.1} parent=5 // pred_region
        %s115 = ssub.s32 %s12, 1
        // Predicated region
        $region13: #{tpu_custom_call.1} parent=11 // pred_check
          %p116 = pneg %p33
        $region14: #{tpu_custom_call.1} parent=11 // pred_check_branch
          %118 = sbr.rel (%p116) target = $region16
        $region15: #{tpu_custom_call.1} parent=11 // pred_region
          %s120 = ssub.s32 128, 128
          %121 = vsyncadd [#allocation4], %s120
          %s123 = sshll.u32 [#allocation3], 4
          %s124 = int_to_ptr.vmem [resolvable:$true] %s123
          %126 = dma.hbm_to_vmem [thread:$0]  %s0, 128, %s124, [#allocation4]
        $region16: #{tpu_custom_call.1} parent=11 // pred_fallthru
          _
        // Predicated region
        $region17: #{tpu_custom_call.1} parent=11 // pred_check
          %p127 = pneg %p54
        $region18: #{tpu_custom_call.1} parent=11 // pred_check_branch
          %129 = sbr.rel (%p127) target = $region20
        $region19: #{tpu_custom_call.1} parent=11 // pred_region
          %s131 = ssub.s32 128, 128
          %132 = vsyncadd [#allocation7], %s131
          %s134 = sshll.u32 [#allocation6], 4
          %s135 = int_to_ptr.vmem [resolvable:$true] %s134
          %137 = dma.hbm_to_vmem [thread:$0]  %s1, 128, %s135, [#allocation7]
        $region20: #{tpu_custom_call.1} parent=11 // pred_fallthru
          _
      $region12: #{tpu_custom_call.1} parent=5 // pred_fallthru
        _
      %p138 = scmp.lt.s32.totalorder %s12, 4
      // Predicated region
      $region21: #{tpu_custom_call.1} parent=5 // pred_check
        %p139 = pneg %p138
      $region22: #{tpu_custom_call.1} parent=5 // pred_check_branch
        %141 = sbr.rel (%p139) target = $region24
      $region23: #{tpu_custom_call.1} parent=5 // pred_region
        // Predicated region
        $region25: #{tpu_custom_call.1} parent=23 // pred_check
          %p142 = pneg %p74
        $region26: #{tpu_custom_call.1} parent=23 // pred_check_branch
          %144 = sbr.rel (%p142) target = $region28
        $region27: #{tpu_custom_call.1} parent=23 // pred_region
          %s145 = sand.u32 %s12, 1
          %s146 = scalar_lea.sflag [#allocation4], %s145
          %s147 = sand.u32 %s64, 1
          %s148 = smul.addr %s147, 16
          %s149 = scalar_lea.vmem [#allocation8], %s148
          %s150 = smul.u32 2, %s12
          %s152 = ssub.s32 256, 256
          %153 = vsyncadd %s146, %s152
          %s154 = smul.addr %s150, 128
          %s155 = scalar_lea.hbm %s2, %s154
          %s157 = sshll.u32 %s149, 4
          %s158 = int_to_ptr.vmem [resolvable:$true] %s157
          %160 = dma.hbm_to_vmem [thread:$0]  %s155, 256, %s158, %s146
        $region28: #{tpu_custom_call.1} parent=23 // pred_fallthru
          _
      $region24: #{tpu_custom_call.1} parent=5 // pred_fallthru
        _
      %p161 = scmp.le.s32.totalorder 1, %s12
      %p162 = scmp.lt.s32.totalorder %s12, 5
      %p163 = pnand %p161, %p162
      %p164 = pneg %p163
      // Predicated region
      $region29: #{tpu_custom_call.1} parent=5 // pred_check
        _
      $region30: #{tpu_custom_call.1} parent=5 // pred_check_branch
        %166 = sbr.rel (%p163) target = $region32
      $region31: #{tpu_custom_call.1} parent=5 // pred_region
        %s167 = ssub.s32 %s12, 1
        // Predicated region
        $region33: #{tpu_custom_call.1} parent=31 // pred_check
          %p168 = pneg %p33
        $region34: #{tpu_custom_call.1} parent=31 // pred_check_branch
          %170 = sbr.rel (%p168) target = $region36
        $region35: #{tpu_custom_call.1} parent=31 // pred_region
          %171 = dma.done [#allocation4], 128
        $region36: #{tpu_custom_call.1} parent=31 // pred_fallthru
          _
        // Predicated region
        $region37: #{tpu_custom_call.1} parent=31 // pred_check
          %p172 = pneg %p54
        $region38: #{tpu_custom_call.1} parent=31 // pred_check_branch
          %174 = sbr.rel (%p172) target = $region40
        $region39: #{tpu_custom_call.1} parent=31 // pred_region
          %175 = dma.done [#allocation7], 128
        $region40: #{tpu_custom_call.1} parent=31 // pred_fallthru
          _
        %s176 = sand.u32 %s17, 1
        %s177 = scalar_lea.sflag [#allocation4], %s176
        %s178 = sand.u32 %s67, 1
        %s179 = smul.addr %s178, 16
        %s180 = scalar_lea.vmem [#allocation8], %s179
        // Predicated region
        $region41: #{tpu_custom_call.1} parent=31 // pred_check
          %p181 = pneg %p80
        $region42: #{tpu_custom_call.1} parent=31 // pred_check_branch
          %183 = sbr.rel (%p181) target = $region44
        $region43: #{tpu_custom_call.1} parent=31 // pred_region
          %184 = dma.done %s177, 256
        $region44: #{tpu_custom_call.1} parent=31 // pred_fallthru
          _
        %p185 = pneg %p33
        %p186 = pneg %p30
        %p187 = pneg %p54
        %p188 = pneg %p51
        %s189 = sand.u32 %s17, 1
        %s190 = scalar_lea.sflag [#allocation4], %s189
        %s191 = sand.u32 %s67, 1
        %s192 = smul.addr %s191, 16
        %s193 = scalar_lea.vmem [#allocation8], %s192
        %p194 = pneg %p80
        %p195 = pneg %p77
        %p196 = pneg %p101
        %p197 = pneg %p98
        %s198 = smul.u32 2, %s17
        %p199 = scmp.eq.s32.totalorder %s17, 0
        // Predicated region
        $region45: #{tpu_custom_call.1} parent=31 // pred_check
          %p200 = pneg %p199
        $region46: #{tpu_custom_call.1} parent=31 // pred_check_branch
          %202 = sbr.rel (%p200) target = $region48
        $region47: #{tpu_custom_call.1} parent=31 // pred_region
          %vm203 = vcmask 64512
          %204 = vst.msk [vmem:[#allocation2] sm:$0xff] %vm203, 0.0
        $region48: #{tpu_custom_call.1} parent=31 // pred_fallthru
          _
        %v205 = vld [vmem:[#allocation3] sm:$0xff]
        %v206 = vld [vmem:[%s180] sm:$0xff]
        %v207 = vld [vmem:[%s180 + $0x8] sm:$0xff]
        %vm208 = vcmask 64512
        %v210 = vsel %vm208, %v205, 0
        %212 = vmatprep.subr.mxu0 %v207
        %213 = vmatpush1.msra.mxu0 %v206
        %214 = vmatprep.subr.mxu0 0.0
        %215 = vmatpush1.msra.mxu0 0.0
        %216 = vmatprep.subr.mxu0 0.0
        %217 = vmatpush1.msra.mxu0 0.0
        %218 = vmatprep.subr.mxu0 0.0
        %219 = vmatpush1.msra.mxu0 0.0
        %220 = vmatprep.subr.mxu0 0.0
        %221 = vmatpush1.msra.mxu0 0.0
        %222 = vmatprep.subr.mxu0 0.0
        %223 = vmatpush1.msra.mxu0 0.0
        %224 = vmatprep.subr.mxu0 0.0
        %225 = vmatpush1.msra.mxu0 0.0
        %226 = vmatprep.subr.mxu0 0.0
        %227 = vmatpush1.msra.mxu0 0.0
        %228 = vmatprep.subr.mxu0 0.0
        %229 = vmatpush1.msra.mxu0 0.0
        %230 = vmatprep.subr.mxu0 0.0
        %231 = vmatpush1.msra.mxu0 0.0
        %232 = vmatprep.subr.mxu0 0.0
        %233 = vmatpush1.msra.mxu0 0.0
        %234 = vmatprep.subr.mxu0 0.0
        %235 = vmatpush1.msra.mxu0 0.0
        %236 = vmatprep.subr.mxu0 0.0
        %237 = vmatpush1.msra.mxu0 0.0
        %238 = vmatprep.subr.mxu0 0.0
        %239 = vmatpush1.msra.mxu0 0.0
        %240 = vmatprep.subr.mxu0 0.0
        %241 = vmatpush1.msra.mxu0 0.0
        %242 = vmatprep.subr.mxu0 0.0
        %243 = vmatpush1.msra.mxu0 0.0
        %244 = vmatprep.subr.mxu0 0.0
        %245 = vmatpush1.msra.mxu0 0.0
        %246 = vmatprep.subr.mxu0 0.0
        %247 = vmatpush1.msra.mxu0 0.0
        %248 = vmatprep.subr.mxu0 0.0
        %249 = vmatpush1.msra.mxu0 0.0
        %250 = vmatprep.subr.mxu0 0.0
        %251 = vmatpush1.msra.mxu0 0.0
        %252 = vmatprep.subr.mxu0 0.0
        %253 = vmatpush1.msra.mxu0 0.0
        %254 = vmatprep.subr.mxu0 0.0
        %255 = vmatpush1.msra.mxu0 0.0
        %256 = vmatprep.subr.mxu0 0.0
        %257 = vmatpush1.msra.mxu0 0.0
        %258 = vmatprep.subr.mxu0 0.0
        %259 = vmatpush1.msra.mxu0 0.0
        %260 = vmatprep.subr.mxu0 0.0
        %261 = vmatpush1.msra.mxu0 0.0
        %262 = vmatprep.subr.mxu0 0.0
        %263 = vmatpush1.msra.mxu0 0.0
        %264 = vmatprep.subr.mxu0 0.0
        %265 = vmatpush1.msra.mxu0 0.0
        %266 = vmatprep.subr.mxu0 0.0
        %267 = vmatpush1.msra.mxu0 0.0
        %268 = vmatprep.subr.mxu0 0.0
        %269 = vmatpush1.msra.mxu0 0.0
        %270 = vmatprep.subr.mxu0 0.0
        %271 = vmatpush1.msra.mxu0 0.0
        %272 = vmatprep.subr.mxu0 0.0
        %273 = vmatpush1.msra.mxu0 0.0
        %274 = vmatprep.subr.mxu0 0.0
        %275 = vmatpush1.msra.mxu0 0.0
        %276 = vmatprep.mubr.f32.mxu0 0.0
        %277 = vmatmul.mubr.f32.gmra.mrb[0].mxu0 %v210
        %v278 = vpop.f32.mrb[0].mxu0
        %v279 = vadd.f32 0.0, %v278
        %v280 = vpop.f32.mrb[0].mxu0
        %v281 = vadd.f32 0.0, %v280
        %282 = vdwg.mxu0
        %v283 = vld [vmem:[#allocation2] sm:$0xff]
        %284 = vmatprep.subr.mxu0 %v281
        %285 = vmatpush1.xpose.msra.mxu0 %v279
        %286 = vmatprep.subr.mxu0 0.0
        %287 = vmatpush1.xpose.msra.mxu0 0.0
        %288 = vmatprep.subr.mxu0 0.0
        %289 = vmatpush1.xpose.msra.mxu0 0.0
        %290 = vmatprep.subr.mxu0 0.0
        %291 = vmatpush1.xpose.msra.mxu0 0.0
        %292 = vmatprep.subr.mxu0 0.0
        %293 = vmatpush1.xpose.msra.mxu0 0.0
        %294 = vmatprep.subr.mxu0 0.0
        %295 = vmatpush1.xpose.msra.mxu0 0.0
        %296 = vmatprep.subr.mxu0 0.0
        %297 = vmatpush1.xpose.msra.mxu0 0.0
        %298 = vmatprep.subr.mxu0 0.0
        %299 = vmatpush1.xpose.msra.mxu0 0.0
        %300 = vmatprep.subr.mxu0 0.0
        %301 = vmatpush1.xpose.msra.mxu0 0.0
        %302 = vmatprep.subr.mxu0 0.0
        %303 = vmatpush1.xpose.msra.mxu0 0.0
        %304 = vmatprep.subr.mxu0 0.0
        %305 = vmatpush1.xpose.msra.mxu0 0.0
        %306 = vmatprep.subr.mxu0 0.0
        %307 = vmatpush1.xpose.msra.mxu0 0.0
        %308 = vmatprep.subr.mxu0 0.0
        %309 = vmatpush1.xpose.msra.mxu0 0.0
        %310 = vmatprep.subr.mxu0 0.0
        %311 = vmatpush1.xpose.msra.mxu0 0.0
        %312 = vmatprep.subr.mxu0 0.0
        %313 = vmatpush1.xpose.msra.mxu0 0.0
        %314 = vmatprep.subr.mxu0 0.0
        %315 = vmatpush1.xpose.msra.mxu0 0.0
        %316 = vmatprep.subr.mxu0 0.0
        %317 = vmatpush1.xpose.msra.mxu0 0.0
        %318 = vmatprep.subr.mxu0 0.0
        %319 = vmatpush1.xpose.msra.mxu0 0.0
        %320 = vmatprep.subr.mxu0 0.0
        %321 = vmatpush1.xpose.msra.mxu0 0.0
        %322 = vmatprep.subr.mxu0 0.0
        %323 = vmatpush1.xpose.msra.mxu0 0.0
        %324 = vmatprep.subr.mxu0 0.0
        %325 = vmatpush1.xpose.msra.mxu0 0.0
        %326 = vmatprep.subr.mxu0 0.0
        %327 = vmatpush1.xpose.msra.mxu0 0.0
        %328 = vmatprep.subr.mxu0 0.0
        %329 = vmatpush1.xpose.msra.mxu0 0.0
        %330 = vmatprep.subr.mxu0 0.0
        %331 = vmatpush1.xpose.msra.mxu0 0.0
        %332 = vmatprep.subr.mxu0 0.0
        %333 = vmatpush1.xpose.msra.mxu0 0.0
        %334 = vmatprep.subr.mxu0 0.0
        %335 = vmatpush1.xpose.msra.mxu0 0.0
        %336 = vmatprep.subr.mxu0 0.0
        %337 = vmatpush1.xpose.msra.mxu0 0.0
        %338 = vmatprep.subr.mxu0 0.0
        %339 = vmatpush1.xpose.msra.mxu0 0.0
        %340 = vmatprep.subr.mxu0 0.0
        %341 = vmatpush1.xpose.msra.mxu0 0.0
        %342 = vmatprep.subr.mxu0 0.0
        %343 = vmatpush1.xpose.msra.mxu0 0.0
        %344 = vmatprep.subr.mxu0 0.0
        %345 = vmatpush1.xpose.msra.mxu0 0.0
        %346 = vmatprep.subr.mxu0 0.0
        %347 = vmatpush1.xpose.msra.mxu0 0.0
        %348 = vmatprep.mubr.f32.mxu0 %v281
        %349 = vmatmul.mubr.f32.gmra.mrb[0].mxu0 %v279
        %v350 = vpop.f32.mrb[0].mxu0
        %v351 = vadd.f32 0.0, %v350
        %v352 = vpop.f32.mrb[0].mxu0
        %353 = vdwg.mxu0
        %v354 = vadd.f32 %v283, %v351
        %355 = vst.msk [vmem:[#allocation2] sm:$0xff] %vm208, %v354
        %p356 = scmp.eq.s32.totalorder %s17, 3
        // Predicated region
        $region49: #{tpu_custom_call.1} parent=31 // pred_check
          %p357 = pneg %p356
        $region50: #{tpu_custom_call.1} parent=31 // pred_check_branch
          %359 = sbr.rel (%p357) target = $region52
        $region51: #{tpu_custom_call.1} parent=31 // pred_region
          %v360 = vld [vmem:[#allocation2] sm:$0xff]
          %v361 = vld [vmem:[#allocation6] sm:$0xff]
          %v362 = vmul.f32 %v360, %v361
          %v363 = vlaneseq
          %v364 = vshrl.u32 %v363, 7
          %v365 = vlaneseq
          %v366 = vand.u32 %v365, 127
          %vm367 = vcmp.eq.s32.totalorder %v364, %v366
          %v368 = vsel %vm367, 1, 0
          %v369 = vcvt.s32.f32 %v368
          %v370 = vmul.f32 %v362, %v369
          %v371 = vsel %vm208, %v370, 0.0
          %372 = vadd.xlane.f32.xlu0 %v371
          %v373 = vpop.xlane.xlu0 %372
          %v374 = vrot.slane %v371, 4
          %v375 = vadd.f32 %v371, %v374
          %v376 = vrot.slane %v375, 2
          %v377 = vadd.f32 %v375, %v376
          %v378 = vrot.slane %v377, 1
          %v379 = vadd.f32 %v377, %v378
          %v380 = vadd.f32 %v373, %v379
          %v381 = vmul.f32 %v362, 2.0
          %v382 = vsub.f32 %v380, %v381
          %v383 = vmax.f32 %v382, 0.0
          %v384 = vrsqrt.pop %v383
          %v385 = vmul.f32 %v383, %v384
          %vm386 = vcmp.eq.f32.partialorder %v383, inf
          %v387 = vsel %vm386, %v383, %v385
          %vm388 = vcmp.eq.f32.partialorder %v383, 0.0
          %v389 = vand.u32 %v383, 2147483648
          %v390 = vsel %vm388, %v389, %v387
          %vm391 = vcmp.lt.s32.totalorder %v364, %v366
          %vm392 = vcmp.lt.s32.totalorder %v366, 4
          %vm393 = vmand %vm391, %vm392
          %v394 = vsel %vm393, %v390, 0.0
          %v395 = vsel %vm208, %v394, 0.0
          %396 = vadd.xlane.f32.xlu0 %v395
          %v397 = vpop.xlane.xlu0 %396
          %v398 = vrot.slane %v397, 4
          %v399 = vadd.f32 %v397, %v398
          %v400 = vrot.slane %v399, 2
          %v401 = vadd.f32 %v399, %v400
          %v402 = vrot.slane %v401, 1
          %v403 = vadd.f32 %v401, %v402
          %v404 = vrcp.pop 6.0
          %v405 = vmul.f32 %v403, %v404
          %vm406 = vcmask 0
          %407 = vst.msk [vmem:[#allocation9] sm:$0x1] %vm406, %v405
        $region52: #{tpu_custom_call.1} parent=31 // pred_fallthru
          _
        // Predicated region
        $region53: #{tpu_custom_call.1} parent=31 // pred_check
          %p408 = pneg %p98
        $region54: #{tpu_custom_call.1} parent=31 // pred_check_branch
          %410 = sbr.rel (%p408) target = $region56
        $region55: #{tpu_custom_call.1} parent=31 // pred_region
          %s412 = ssub.s32 16, 16
          %413 = vsyncadd [#allocation5], %s412
          %s415 = sshll.u32 [#allocation9], 4
          %s416 = int_to_ptr.vmem [resolvable:$true] %s415
          %418 = dma.vmem_to_hbm [thread:$0]  %s416, 16, %s3, [#allocation5]
        $region56: #{tpu_custom_call.1} parent=31 // pred_fallthru
          _
        // Predicated region
        $region57: #{tpu_custom_call.1} parent=31 // pred_check
          %p419 = pneg %p98
        $region58: #{tpu_custom_call.1} parent=31 // pred_check_branch
          %421 = sbr.rel (%p419) target = $region60
        $region59: #{tpu_custom_call.1} parent=31 // pred_region
          %422 = dma.done [#allocation5], 16
        $region60: #{tpu_custom_call.1} parent=31 // pred_fallthru
          _
      $region32: #{tpu_custom_call.1} parent=5 // pred_fallthru
        _
      %p423 = scmp.le.s32.totalorder 2, %s12
      // Predicated region
      $region61: #{tpu_custom_call.1} parent=5 // pred_check
        %p424 = pneg %p423
      $region62: #{tpu_custom_call.1} parent=5 // pred_check_branch
        %426 = sbr.rel (%p424) target = $region64
      $region63: #{tpu_custom_call.1} parent=5 // pred_region
        %s427 = ssub.s32 %s12, 2
      $region64: #{tpu_custom_call.1} parent=5 // pred_fallthru
        _
    $region6: #{tpu_custom_call.1} parent=1 // loop_footer
      %s16 = sadd.s32 1, %s12
    $region7: #{tpu_custom_call.1} parent=1 // loop_footer_branch
      %11 = sbr.rel target = $region3
    $region8: #{tpu_custom_call.1} parent=1 // loop_exit
      _
    %428 = vsyncpa [#allocation4], 1
    %s429 = scalar_lea.sflag [#allocation4], 1
    %430 = vsyncpa %s429, 1
    %431 = vsyncpa [#allocation7], 1
    %432 = vsyncpa [#allocation5], 1
    %s433 = scalar_lea.sflag [#allocation5], 1
    %434 = vsyncpa %s433, 1

</llo_original>
